<compile_context>
chip_gen: v7x
topology: tpu7x:2x2x1
jax: 0.10.0
libtpu: 0.0.40
codegen_flags: <defaults>
</compile_context>

<pallas_src>
import jax
import jax.numpy as jnp
from jax.experimental import pallas as pl
from jax.experimental.pallas import tpu as pltpu


# --------------------------------------------------------------------------
# Kernel: one (TN, in_sum) tile of rows -> fused affine + softmax.
# --------------------------------------------------------------------------
def _affine_softmax_kernel(x_ref, w_ref, b_ref, out_ref):
    # x_ref: (TN, in_sum)   w_ref: (in_sum, out_ch)   b_ref: (1, out_ch)
    logits = (jnp.dot(x_ref[...], w_ref[...],
                      preferred_element_type=jnp.float32)
              + b_ref[...])                                   # (TN, out_ch) f32

    # Softmax over the last dim, kept in f32 on all generations (v5e has no
    # bf16 VPU/EUP, and out_ch is tiny so this is cheap everywhere).
    m = jnp.max(logits, axis=-1, keepdims=True)
    e = jnp.exp(logits - m)
    out_ref[...] = (e / jnp.sum(e, axis=-1, keepdims=True)).astype(out_ref.dtype)


# --------------------------------------------------------------------------
# Wrapper: weight precomposition (plain JAX, constant-size) + gridded call.
# --------------------------------------------------------------------------
def _round_up(x, m):
    return ((x + m - 1) // m) * m


def _compose_affine(params):
    """Collapse the 8 affine layers into one (in_num+in_kind, out_ch) map.

    Preserves the torch.cat((x_num, x_kind), dim=-2) channel order: the num
    branch feeds the TOP 32 input channels of cnn_3, kind feeds the BOTTOM 32.
    """
    def lin(name):                       # Linear: w (out, in), b (out,)
        w, b = params[name]
        return w.T, b                    # (in, out), (out,)

    def conv(name):                      # Conv1d(k=1): w (out, in, 1), b (out,)
        w, b = params[name]
        return w[:, :, 0].T, b           # (in, out), (out,)

    wfn, bfn = lin("fc_input_num")       # (in_num, 128)
    w1n, b1n = conv("cnn_num_1")         # (128, 64)
    w2n, b2n = conv("cnn_num_2")         # (64, 32)
    wfk, bfk = lin("fc_input_kind")      # (in_kind, 128)
    w1k, b1k = conv("cnn_kind_1")        # (128, 64)
    w2k, b2k = conv("cnn_kind_2")        # (64, 32)
    w3, b3 = conv("cnn_3")               # (64, 32)
    wo, bo = lin("fc_output")            # (32, out_ch)

    w3_top, w3_bot = w3[:32, :], w3[32:, :]      # num rows first, then kind

    # Per-branch affine: x_branch = inp @ m_* + c_*
    m_num = wfn @ w1n @ w2n                              # (in_num, 32)
    c_num = (bfn @ w1n + b1n) @ w2n + b2n                # (32,)
    m_kind = wfk @ w1k @ w2k                             # (in_kind, 32)
    c_kind = (bfk @ w1k + b1k) @ w2k + b2k               # (32,)

    # Through cnn_3 (split by concat order) and fc_output.
    m = jnp.concatenate([m_num @ w3_top, m_kind @ w3_bot], axis=0) @ wo  # (in_sum, out)
    c = (c_num @ w3_top + c_kind @ w3_bot + b3) @ wo + bo                # (out,)
    return m.astype(jnp.float32), c.reshape(1, -1).astype(jnp.float32)


def mult_cnn_forward(num_input, kind_input, params, *, tile_n=1024):
    """num_input: (N, in_num) f32, kind_input: (N, in_kind) f32 -> (N, out_ch)."""
    N = num_input.shape[0]

    # Precompose the purely-linear chain (constant-size work, independent of N).
    w, b = _compose_affine(params)                       # (in_sum, out_ch), (1, out_ch)
    out_ch = w.shape[1]

    # Single combined input array: one DMA stream instead of two lane-padded ones.
    x = jnp.concatenate([num_input, kind_input], axis=-1).astype(jnp.float32)
    in_sum = x.shape[1]

    # Row-tile: multiple of 8 sublanes, capped by (rounded-up) N.  At the
    # default 1024 rows the double-buffered tiles use ~2 MiB of VMEM, well
    # under the scoped default on every generation (incl. v7x's 64 MiB chip).
    tn = min(_round_up(max(tile_n, 8), 8), _round_up(N, 8))
    grid = (pl.cdiv(N, tn),)             # partial last block handled by Pallas

    flops = 2 * N * in_sum * out_ch + 5 * N * out_ch     # matmul + softmax
    bytes_accessed = 4 * (N * in_sum + N * out_ch + in_sum * out_ch + out_ch)

    return pl.pallas_call(
        _affine_softmax_kernel,
        out_shape=jax.ShapeDtypeStruct((N, out_ch), jnp.float32),
        grid=grid,
        in_specs=[
            # Row tiles of the combined input stream over the N grid axis.
            pl.BlockSpec((tn, in_sum), lambda i: (i, 0)),
            # Composed weight / bias: constant index_map -> stay resident in VMEM.
            pl.BlockSpec((in_sum, out_ch), lambda i: (0, 0)),
            pl.BlockSpec((1, out_ch), lambda i: (0, 0)),
        ],
        out_specs=pl.BlockSpec((tn, out_ch), lambda i: (i, 0)),
        compiler_params=pltpu.CompilerParams(
            # Independent row tiles: lets the Mosaic runtime shard the grid
            # across both TensorCores on v7x (megacore).  No vmem_limit_bytes
            # needed: the per-step footprint is far below every gen's default.
            dimension_semantics=("parallel",),
        ),
        cost_estimate=pl.CostEstimate(
            flops=flops,
            transcendentals=N * out_ch,
            bytes_accessed=bytes_accessed,
        ),
    )(x, w, b)


# --------------------------------------------------------------------------
# Parameter init (PyTorch-default-style uniform +-1/sqrt(fan_in)).
# --------------------------------------------------------------------------
def init_params(key, input_num_channel, input_kind_channel, output_channel):
    params = {}

    def uniform(k, shape, fan_in):
        bound = 1.0 / jnp.sqrt(jnp.float32(fan_in))
        return jax.random.uniform(k, shape, jnp.float32, -bound, bound)

    def add_linear(name, k, out_f, in_f):
        kw, kb = jax.random.split(k)
        params[name] = (uniform(kw, (out_f, in_f), in_f),
                        uniform(kb, (out_f,), in_f))

    def add_conv1d(name, k, out_c, in_c):
        kw, kb = jax.random.split(k)
        params[name] = (uniform(kw, (out_c, in_c, 1), in_c),
                        uniform(kb, (out_c,), in_c))

    keys = jax.random.split(key, 8)
    add_linear("fc_input_num", keys[0], 128, input_num_channel)
    add_conv1d("cnn_num_1", keys[1], 64, 128)
    add_conv1d("cnn_num_2", keys[2], 32, 64)
    add_linear("fc_input_kind", keys[3], 128, input_kind_channel)
    add_conv1d("cnn_kind_1", keys[4], 64, 128)
    add_conv1d("cnn_kind_2", keys[5], 32, 64)
    add_conv1d("cnn_3", keys[6], 32, 64)
    add_linear("fc_output", keys[7], output_channel, 32)
    return params


# --------------------------------------------------------------------------
# Pure-JAX reference mirroring the PyTorch graph layer-by-layer (with permutes).
# --------------------------------------------------------------------------
def reference_forward(num_input, kind_input, params):
    def lin(x, name):
        w, b = params[name]
        return x @ w.T + b

    def conv1d(x_cn, name):                     # x_cn: (C_in, N)
        w, b = params[name]
        return w[:, :, 0] @ x_cn + b[:, None]   # (C_out, N)

    x_num = lin(num_input, "fc_input_num").T
    x_num = conv1d(x_num, "cnn_num_1")
    x_num = conv1d(x_num, "cnn_num_2")
    x_kind = lin(kind_input, "fc_input_kind").T
    x_kind = conv1d(x_kind, "cnn_kind_1")
    x_kind = conv1d(x_kind, "cnn_kind_2")
    x = jnp.concatenate([x_num, x_kind], axis=-2)
    x = conv1d(x, "cnn_3").T
    x = lin(x, "fc_output")
    return jax.nn.softmax(x, axis=-1)


if __name__ == "__main__":
    N = 40                      # rows fed to the Linear layers
    input_num_channel = 4
    input_kind_channel = 6
    output_channel = 5

    root = jax.random.PRNGKey(0)
    k_params, k_num, k_kind = jax.random.split(root, 3)

    params = init_params(k_params, input_num_channel, input_kind_channel,
                         output_channel)
    num_input = jax.random.normal(k_num, (N, input_num_channel), jnp.float32)
    kind_input = jax.random.normal(k_kind, (N, input_kind_channel), jnp.float32)

    ref = reference_forward(num_input, kind_input, params)

    # Single-tile path (default tile covers all rows).
    out = jax.block_until_ready(mult_cnn_forward(num_input, kind_input, params))
    assert out.shape == (N, output_channel)
    assert jnp.allclose(out, ref, atol=3e-5, rtol=1e-4)
    assert jnp.allclose(jnp.sum(out, axis=-1), 1.0, atol=1e-5)

    # Multi-tile gridded path (3 grid steps, partial last block of 8 rows).
    out_tiled = jax.block_until_ready(
        mult_cnn_forward(num_input, kind_input, params, tile_n=16))
    assert jnp.allclose(out_tiled, ref, atol=3e-5, rtol=1e-4)

    print("KERNEL_OK")
</pallas_src>

<mosaic_0001>
module attributes {stable_mosaic.version = 11 : i64} {
  func.func @_affine_softmax_kernel(%arg0: i32, %arg1: memref<40x10xf32, #tpu.memory_space<vmem>>, %arg2: memref<10x5xf32, #tpu.memory_space<vmem>>, %arg3: memref<1x5xf32, #tpu.memory_space<vmem>>, %arg4: memref<40x5xf32, #tpu.memory_space<vmem>>) attributes {dimension_semantics = [#tpu.dimension_semantics<parallel>], iteration_bounds = array<i64: 1>, scalar_prefetch = 0 : i64, scratch_operands = 0 : i64, tpu.core_type = #tpu.core_type<tc>, window_params = [{transform_indices = @transform_0, window_bounds = array<i64: 40, 10>}, {pipeline_mode = #tpu.pipeline_mode<synchronous>, transform_indices = @transform_1, window_bounds = array<i64: 10, 5>}, {pipeline_mode = #tpu.pipeline_mode<synchronous>, transform_indices = @transform_2, window_bounds = array<i64: 1, 5>}, {transform_indices = @transform_3, window_bounds = array<i64: 40, 5>}]} {
    %c0 = arith.constant 0 : index
    %c0_0 = arith.constant 0 : index
    %0 = vector.load %arg1[%c0, %c0_0] : memref<40x10xf32, #tpu.memory_space<vmem>>, vector<40x10xf32>
    %c0_1 = arith.constant 0 : index
    %c0_2 = arith.constant 0 : index
    %1 = vector.load %arg2[%c0_1, %c0_2] : memref<10x5xf32, #tpu.memory_space<vmem>>, vector<10x5xf32>
    %cst = arith.constant dense<0.000000e+00> : vector<40x5xf32>
    %2 = tpu.matmul %0, %1, %cst {dimension_numbers = #tpu.dot_dimension_numbers<[1], [0], [0], [1], [0, 0, 1, 1], [], []>} : vector<40x10xf32>, vector<10x5xf32>, vector<40x5xf32> -> vector<40x5xf32>
    %c0_3 = arith.constant 0 : index
    %c0_4 = arith.constant 0 : index
    %3 = vector.load %arg3[%c0_3, %c0_4] : memref<1x5xf32, #tpu.memory_space<vmem>>, vector<1x5xf32>
    %4 = vector.broadcast %3 : vector<1x5xf32> to vector<40x5xf32>
    %5 = arith.addf %2, %4 : vector<40x5xf32>
    %cst_5 = arith.constant dense<0xFF800000> : vector<40xf32>
    %6 = vector.multi_reduction <maximumf>, %5, %cst_5 [1] : vector<40x5xf32> to vector<40xf32>
    %7 = vector.shape_cast %6 : vector<40xf32> to vector<40x1xf32>
    %8 = vector.broadcast %7 : vector<40x1xf32> to vector<40x5xf32>
    %9 = arith.subf %5, %8 : vector<40x5xf32>
    %10 = math.exp %9 : vector<40x5xf32>
    %cst_6 = arith.constant dense<0.000000e+00> : vector<40xf32>
    %11 = vector.multi_reduction <add>, %10, %cst_6 [1] : vector<40x5xf32> to vector<40xf32>
    %12 = vector.shape_cast %11 : vector<40xf32> to vector<40x1xf32>
    %13 = vector.broadcast %12 : vector<40x1xf32> to vector<40x5xf32>
    %14 = arith.divf %10, %13 : vector<40x5xf32>
    %c0_7 = arith.constant 0 : index
    %c0_8 = arith.constant 0 : index
    %15 = vector.load %arg4[%c0_7, %c0_8] : memref<40x5xf32, #tpu.memory_space<vmem>>, vector<40x5xf32>
    tpu.vector_store %arg4[%c0_7, %c0_8], %14 {strides = array<i32>} : memref<40x5xf32, #tpu.memory_space<vmem>>, vector<40x5xf32>,
    return
  }
  func.func @transform_0(%arg0: i32) -> (i32, i32) {
    %c0_i32 = arith.constant 0 : i32
    %c0_i32_0 = arith.constant 0 : i32
    return %arg0, %c0_i32 : i32, i32
  }
  func.func @transform_1(%arg0: i32) -> (i32, i32) {
    %c0_i32 = arith.constant 0 : i32
    %c0_i32_0 = arith.constant 0 : i32
    %c0_i32_1 = arith.constant 0 : i32
    return %c0_i32, %c0_i32_0 : i32, i32
  }
  func.func @transform_2(%arg0: i32) -> (i32, i32) {
    %c0_i32 = arith.constant 0 : i32
    %c0_i32_0 = arith.constant 0 : i32
    %c0_i32_1 = arith.constant 0 : i32
    return %c0_i32, %c0_i32_0 : i32, i32
  }
  func.func @transform_3(%arg0: i32) -> (i32, i32) {
    %c0_i32 = arith.constant 0 : i32
    %c0_i32_0 = arith.constant 0 : i32
    return %arg0, %c0_i32 : i32, i32
  }
}

</mosaic_0001>

<llo_original>
// kernel: tpu_custom_call.1
$region0: #{tpu_custom_call.1}
  #allocation0 [shape = 'u32[]', space=smem, size = 0x4, offset = 0x4, fixed_abs, tag = 'smem constant byte address 0x4 - core index']
  #allocation1 [shape = 'u32[144,128]{1,0:T(1,128)}', space=vmem, size = 0x12000, scoped, tag = 'internal scratch']
  %s0 = inlined_call_operand.vmem [shape: f32[40,10], index: 0, kind: input, shape index: {}]
  %s1 = inlined_call_operand.vmem [shape: f32[10,5], index: 1, kind: input, shape index: {}]
  %s2 = inlined_call_operand.vmem [shape: f32[1,5], index: 2, kind: input, shape index: {}]
  %s3 = inlined_call_operand.vmem [shape: f32[40,5], index: 3, kind: output, shape index: {}]
  %s4 = sld [smem:[#allocation0]]
  $region22: #{tpu_custom_call.1} parent=0
    _
  %s6 = ssub.s32 1, %s4
  %s7 = scalar_select 0, %s6, %s4
  // Predicated region
  $region2: #{tpu_custom_call.1} parent=0 // pred_check
    _
  $region3: #{tpu_custom_call.1} parent=0 // pred_check_branch
    %9 = sbr.rel (0) target = $region5
  $region4: #{tpu_custom_call.1} parent=0 // pred_region
    _
  $region5: #{tpu_custom_call.1} parent=0 // pred_fallthru
    _
  // Predicated region
  $region6: #{tpu_custom_call.1} parent=0 // pred_check
    _
  $region7: #{tpu_custom_call.1} parent=0 // pred_check_branch
    %11 = sbr.rel (0) target = $region9
  $region8: #{tpu_custom_call.1} parent=0 // pred_region
    _
  $region9: #{tpu_custom_call.1} parent=0 // pred_fallthru
    _
  // Predicated region
  $region10: #{tpu_custom_call.1} parent=0 // pred_check
    _
  $region11: #{tpu_custom_call.1} parent=0 // pred_check_branch
    %13 = sbr.rel (0) target = $region13
  $region12: #{tpu_custom_call.1} parent=0 // pred_region
    _
  $region13: #{tpu_custom_call.1} parent=0 // pred_fallthru
    _
  %v14 = vld [vmem:[%s0] sm:$0xff]
  %v15 = vld [vmem:[%s0 + $0x8] sm:$0xff]
  %v16 = vld [vmem:[%s0 + $0x10] sm:$0xff]
  %v17 = vld [vmem:[%s0 + $0x18] sm:$0xff]
  %v18 = vld [vmem:[%s0 + $0x20] sm:$0xff]
  %v19 = vld [vmem:[%s1] sm:$0xff]
  %v20 = vld [vmem:[%s1 + $0x8] sm:$0x3]
  %v21 = vld [vmem:[%s2] sm:$0x1]
  %v23 = vlaneseq
  %v24 = vshrl.u32 %v23, 7
  %v25 = vsub.s32 0, %v24
  %v26 = vrot.slane %v21, %v25
  %vm28 = vcmask 80896
  %v30 = vsel %vm28, %v14, 0
  %v33 = vsel %vm28, %v15, 0
  %v36 = vsel %vm28, %v16, 0
  %v39 = vsel %vm28, %v17, 0
  %v42 = vsel %vm28, %v18, 0
  %vm44 = vcmask 1041408
  %v46 = vsel %vm44, %v20, 0
  %48 = vmatprep.subr.mxu0 0.0
  %49 = vmatpush1.msra.mxu0 %v19
  %50 = vmatprep.subr.mxu0 0.0
  %51 = vmatpush1.msra.mxu0 %v46
  %52 = vmatprep.subr.mxu0 0.0
  %53 = vmatpush1.msra.mxu0 0.0
  %54 = vmatprep.subr.mxu0 0.0
  %55 = vmatpush1.msra.mxu0 0.0
  %56 = vmatprep.subr.mxu0 0.0
  %57 = vmatpush1.msra.mxu0 0.0
  %58 = vmatprep.subr.mxu0 0.0
  %59 = vmatpush1.msra.mxu0 0.0
  %60 = vmatprep.subr.mxu0 0.0
  %61 = vmatpush1.msra.mxu0 0.0
  %62 = vmatprep.subr.mxu0 0.0
  %63 = vmatpush1.msra.mxu0 0.0
  %64 = vmatprep.subr.mxu0 0.0
  %65 = vmatpush1.msra.mxu0 0.0
  %66 = vmatprep.subr.mxu0 0.0
  %67 = vmatpush1.msra.mxu0 0.0
  %68 = vmatprep.subr.mxu0 0.0
  %69 = vmatpush1.msra.mxu0 0.0
  %70 = vmatprep.subr.mxu0 0.0
  %71 = vmatpush1.msra.mxu0 0.0
  %72 = vmatprep.subr.mxu0 0.0
  %73 = vmatpush1.msra.mxu0 0.0
  %74 = vmatprep.subr.mxu0 0.0
  %75 = vmatpush1.msra.mxu0 0.0
  %76 = vmatprep.subr.mxu0 0.0
  %77 = vmatpush1.msra.mxu0 0.0
  %78 = vmatprep.subr.mxu0 0.0
  %79 = vmatpush1.msra.mxu0 0.0
  %80 = vmatprep.subr.mxu0 0.0
  %81 = vmatpush1.msra.mxu0 0.0
  %82 = vmatprep.subr.mxu0 0.0
  %83 = vmatpush1.msra.mxu0 0.0
  %84 = vmatprep.subr.mxu0 0.0
  %85 = vmatpush1.msra.mxu0 0.0
  %86 = vmatprep.subr.mxu0 0.0
  %87 = vmatpush1.msra.mxu0 0.0
  %88 = vmatprep.subr.mxu0 0.0
  %89 = vmatpush1.msra.mxu0 0.0
  %90 = vmatprep.subr.mxu0 0.0
  %91 = vmatpush1.msra.mxu0 0.0
  %92 = vmatprep.subr.mxu0 0.0
  %93 = vmatpush1.msra.mxu0 0.0
  %94 = vmatprep.subr.mxu0 0.0
  %95 = vmatpush1.msra.mxu0 0.0
  %96 = vmatprep.subr.mxu0 0.0
  %97 = vmatpush1.msra.mxu0 0.0
  %98 = vmatprep.subr.mxu0 0.0
  %99 = vmatpush1.msra.mxu0 0.0
  %100 = vmatprep.subr.mxu0 0.0
  %101 = vmatpush1.msra.mxu0 0.0
  %102 = vmatprep.subr.mxu0 0.0
  %103 = vmatpush1.msra.mxu0 0.0
  %104 = vmatprep.subr.mxu0 0.0
  %105 = vmatpush1.msra.mxu0 0.0
  %106 = vmatprep.subr.mxu0 0.0
  %107 = vmatpush1.msra.mxu0 0.0
  %108 = vmatprep.subr.mxu0 0.0
  %109 = vmatpush1.msra.mxu0 0.0
  %110 = vmatprep.subr.mxu0 0.0
  %111 = vmatpush1.msra.mxu0 0.0
  %112 = vmatprep.mubr.f32.mxu0 0.0
  %113 = vmatmul.mubr.f32.gmra.mrb[0].mxu0 %v30
  %v114 = vpop.f32.mrb[0].mxu0
  %v115 = vadd.f32 %v26, %v114
  %v116 = vpop.f32.mrb[0].mxu0
  %117 = vmatprep.mubr.f32.mxu0 0.0
  %118 = vmatmul.mubr.f32.gmra.mrb[0].mxu0 %v33
  %v119 = vpop.f32.mrb[0].mxu0
  %v120 = vadd.f32 %v26, %v119
  %v121 = vpop.f32.mrb[0].mxu0
  %122 = vmatprep.mubr.f32.mxu0 0.0
  %123 = vmatmul.mubr.f32.gmra.mrb[0].mxu0 %v36
  %v124 = vpop.f32.mrb[0].mxu0
  %v125 = vadd.f32 %v26, %v124
  %v126 = vpop.f32.mrb[0].mxu0
  %127 = vmatprep.mubr.f32.mxu0 0.0
  %128 = vmatmul.mubr.f32.gmra.mrb[0].mxu0 %v39
  %v129 = vpop.f32.mrb[0].mxu0
  %v130 = vadd.f32 %v26, %v129
  %v131 = vpop.f32.mrb[0].mxu0
  %132 = vmatprep.mubr.f32.mxu0 0.0
  %133 = vmatmul.mubr.f32.gmra.mrb[0].mxu0 %v42
  %v134 = vpop.f32.mrb[0].mxu0
  %v135 = vadd.f32 %v26, %v134
  %v136 = vpop.f32.mrb[0].mxu0
  %137 = vdwg.mxu0
  %vm138 = vcmask 39936
  %v139 = vsel %vm138, %v115, -inf
  %140 = vmax.xlane.f32.xlu0 %v139
  %v141 = vpop.xlane.xlu0 %140
  %v142 = vsel %vm138, %v120, -inf
  %143 = vmax.xlane.f32.xlu0 %v142
  %v144 = vpop.xlane.xlu0 %143
  %v145 = vsel %vm138, %v125, -inf
  %146 = vmax.xlane.f32.xlu0 %v145
  %v147 = vpop.xlane.xlu0 %146
  %v148 = vsel %vm138, %v130, -inf
  %149 = vmax.xlane.f32.xlu0 %v148
  %v150 = vpop.xlane.xlu0 %149
  %v151 = vsel %vm138, %v135, -inf
  %152 = vmax.xlane.f32.xlu0 %v151
  %v153 = vpop.xlane.xlu0 %152
  %v154 = vsub.f32 %v115, %v141
  %v155 = vsub.f32 %v120, %v144
  %v156 = vsub.f32 %v125, %v147
  %v157 = vsub.f32 %v130, %v150
  %v158 = vsub.f32 %v135, %v153
  %v159 = vmul.f32 %v154, 1.442695
  %v160 = vpow.pop %v159
  %v161 = vmul.f32 %v155, 1.442695
  %v162 = vpow.pop %v161
  %v163 = vmul.f32 %v156, 1.442695
  %v164 = vpow.pop %v163
  %v165 = vmul.f32 %v157, 1.442695
  %v166 = vpow.pop %v165
  %v167 = vmul.f32 %v158, 1.442695
  %v168 = vpow.pop %v167
  %v169 = vsel %vm138, %v160, 0.0
  %170 = vadd.xlane.f32.xlu0 %v169
  %v171 = vpop.xlane.xlu0 %170
  %v172 = vsel %vm138, %v162, 0.0
  %173 = vadd.xlane.f32.xlu0 %v172
  %v174 = vpop.xlane.xlu0 %173
  %v175 = vsel %vm138, %v164, 0.0
  %176 = vadd.xlane.f32.xlu0 %v175
  %v177 = vpop.xlane.xlu0 %176
  %v178 = vsel %vm138, %v166, 0.0
  %179 = vadd.xlane.f32.xlu0 %v178
  %v180 = vpop.xlane.xlu0 %179
  %v181 = vsel %vm138, %v168, 0.0
  %182 = vadd.xlane.f32.xlu0 %v181
  %v183 = vpop.xlane.xlu0 %182
  %v184 = vrcp.pop %v171
  %v185 = vmul.f32 %v160, %v184
  %v186 = vrcp.pop %v174
  %v187 = vmul.f32 %v162, %v186
  %v188 = vrcp.pop %v177
  %v189 = vmul.f32 %v164, %v188
  %v190 = vrcp.pop %v180
  %v191 = vmul.f32 %v166, %v190
  %v192 = vrcp.pop %v183
  %v193 = vmul.f32 %v168, %v192
  %194 = vst.msk [vmem:[%s3] sm:$0xff] %vm138, %v185
  %195 = vst.msk [vmem:[%s3 + $0x8] sm:$0xff] %vm138, %v187
  %196 = vst.msk [vmem:[%s3 + $0x10] sm:$0xff] %vm138, %v189
  %197 = vst.msk [vmem:[%s3 + $0x18] sm:$0xff] %vm138, %v191
  %198 = vst.msk [vmem:[%s3 + $0x20] sm:$0xff] %vm138, %v193
  // Predicated region
  $region14: #{tpu_custom_call.1} parent=0 // pred_check
    _
  $region15: #{tpu_custom_call.1} parent=0 // pred_check_branch
    %200 = sbr.rel (0) target = $region17
  $region16: #{tpu_custom_call.1} parent=0 // pred_region
    _
  $region17: #{tpu_custom_call.1} parent=0 // pred_fallthru
    _
  // Predicated region
  $region18: #{tpu_custom_call.1} parent=0 // pred_check
    _
  $region19: #{tpu_custom_call.1} parent=0 // pred_check_branch
    %202 = sbr.rel (0) target = $region21
  $region20: #{tpu_custom_call.1} parent=0 // pred_region
    _
  $region21: #{tpu_custom_call.1} parent=0 // pred_fallthru
    _

</llo_original>
